<compile_context>
chip_gen: v7x
topology: tpu7x:2x2x1
jax: 0.10.0
libtpu: 0.0.40
codegen_flags: <defaults>
</compile_context>

<pallas_src>
import functools

import jax
import jax.numpy as jnp
from jax.experimental import pallas as pl
from jax.experimental.pallas import tpu as pltpu


_LANE = 128


# ----------------------------- Pallas kernels ------------------------------

def _sum_kernel(a_ref, b_ref, o_ref):
    o_ref[...] = a_ref[...] + b_ref[...]


def _fused_cf_kernel(mode, with_extra_fc, shortcut, *refs):
    """Channels-first fused merge on (C, T_pix) tiles.

    mode in {'Concat', 'Weighted'}; with_extra_fc / shortcut are Python
    statics selecting the torch branches.
    """
    if with_extra_fc:
        (vis_ref, txt_ref, wv_ref, bv_ref, wt_ref, bt_ref,
         wav_ref, wat_ref, ba_ref, out_ref) = refs
    else:
        vis_ref, txt_ref, wav_ref, wat_ref, ba_ref, out_ref = refs

    if with_extra_fc:
        # Load once as bf16 for the MXU; ReLU on the f32 accumulator.
        v_in = vis_ref[...].astype(jnp.bfloat16)            # (C, TP)
        t_in = txt_ref[...].astype(jnp.bfloat16)
        v = jnp.maximum(
            jnp.dot(wv_ref[...], v_in, preferred_element_type=jnp.float32)
            + bv_ref[...], 0.0)                              # f32 (C, TP)
        t = jnp.maximum(
            jnp.dot(wt_ref[...], t_in, preferred_element_type=jnp.float32)
            + bt_ref[...], 0.0)
        v_mm = v.astype(jnp.bfloat16)
        t_mm = t.astype(jnp.bfloat16)
    else:
        # Blend uses the unmodified f32 activations; only the MXU input is
        # quantized to bf16 (weights are bf16 anyway).
        v = vis_ref[...].astype(jnp.float32)
        t = txt_ref[...].astype(jnp.float32)
        v_mm = vis_ref[...].astype(jnp.bfloat16)
        t_mm = txt_ref[...].astype(jnp.bfloat16)

    # Alpha projection with the concat folded into split weights:
    #   z = Wa @ [v; t] + b  ==  Wa_v @ v + Wa_t @ t + b
    z = (jnp.dot(wav_ref[...], v_mm, preferred_element_type=jnp.float32)
         + jnp.dot(wat_ref[...], t_mm, preferred_element_type=jnp.float32)
         + ba_ref[...])

    if mode == 'Concat':
        out = z
    else:  # Weighted
        alpha = 1.0 / (1.0 + jnp.exp(-z))                    # f32 sigmoid (EUP)
        out = v + alpha * t if shortcut else alpha * v + (1.0 - alpha) * t

    out_ref[...] = out.astype(out_ref.dtype)


# --------------------------- pallas_call wrappers ---------------------------

def _sum_call(vis, txt):
    """Elementwise sum on the contiguous NCHW buffer, no pads, no transposes."""
    shape = vis.shape
    total = int(vis.size)
    dtype = vis.dtype

    if total % _LANE == 0:
        rows, cols = total // _LANE, _LANE                    # lane-dense view
    else:
        # Ragged flat size: natural (B*C, H*W) view; full last dim is a legal
        # block shape and avoids any jnp.pad / concat HBM copies.
        rows = shape[0] * shape[1]
        cols = total // rows
    v2 = vis.reshape(rows, cols)
    t2 = txt.reshape(rows, cols)

    # Row tile: large (amortize ~0.35us/step), >=2 steps when possible so both
    # v7x TensorCores get work, bounded so 3 streams x 2 buffers fit well
    # inside every generation's scoped-VMEM default.
    bytes_per_row = cols * jnp.dtype(dtype).itemsize
    tm_budget = max(8, (((12 << 20) // (6 * max(1, bytes_per_row))) // 8) * 8)
    tm = min(2048, tm_budget, max(8, (((rows + 1) // 2 + 7) // 8) * 8))
    if rows <= tm:
        tm = rows                      # full dim -> always a legal block shape
    grid = (pl.cdiv(rows, tm),)

    out2 = pl.pallas_call(
        _sum_kernel,
        out_shape=jax.ShapeDtypeStruct((rows, cols), dtype),
        grid=grid,
        in_specs=[pl.BlockSpec((tm, cols), lambda i: (i, 0)),
                  pl.BlockSpec((tm, cols), lambda i: (i, 0))],
        out_specs=pl.BlockSpec((tm, cols), lambda i: (i, 0)),
        compiler_params=pltpu.CompilerParams(
            dimension_semantics=("parallel",)),
    )(v2, t2)
    return out2.reshape(shape)


def _pick_tp(c, in_bytes, vmem_budget_bytes=12 << 20):
    """Pixel-tile width. Budgets BOTH the double-buffered DMA tiles
    (2 inputs + 1 output, input dtype) and the in-kernel temporaries
    (~4 f32 + 2 bf16 values per (C, TP) element), so real VMEM use stays
    inside the smallest scoped default (v5e: 16 MiB)."""
    per_elem = 3 * 2 * in_bytes + 4 * 4 + 2 * 2
    tp = vmem_budget_bytes // (per_elem * c)
    return max(_LANE, (tp // _LANE) * _LANE)


def _fused_call(mode, with_extra_fc, shortcut, vis, txt, params):
    b, c, h, w = vis.shape
    hw = h * w
    v3 = vis.reshape(b, c, hw)                 # free reshape, stays NCHW
    t3 = txt.reshape(b, c, hw)
    wv, bv, wt, bt, wav, wat, ba = params

    in_bytes = jnp.dtype(vis.dtype).itemsize
    tp = _pick_tp(c, in_bytes)
    if b == 1 and hw > 2 * _LANE:
        # Batch gives no grid parallelism at inference; split the pixel axis
        # so megacore still has >=2 tiles to shard.
        tp = min(tp, pl.cdiv(pl.cdiv(hw, 2), _LANE) * _LANE)
    if hw <= tp:
        tp = hw                                # full last dim -> no masking
    grid = (pl.cdiv(hw, tp), b)                # pixel axis leads

    act_spec = pl.BlockSpec((None, c, tp), lambda pi, bi: (bi, 0, pi))
    # TODO(synk): pipeline_mode=pl.Buffered(1) on the constant weight/bias
    # specs once verified (saves double-buffered VMEM for C >= 256 levels).
    full = lambda arr: pl.BlockSpec(arr.shape, lambda pi, bi: (0,) * arr.ndim)

    if with_extra_fc:
        args = (v3, t3, wv, bv, wt, bt, wav, wat, ba)
        in_specs = [act_spec, act_spec,
                    full(wv), full(bv), full(wt), full(bt),
                    full(wav), full(wat), full(ba)]
    else:
        # Unused projection weights are not passed at all (no DMA/VMEM cost).
        args = (v3, t3, wav, wat, ba)
        in_specs = [act_spec, act_spec, full(wav), full(wat), full(ba)]

    kernel = functools.partial(_fused_cf_kernel, mode, with_extra_fc, shortcut)
    out3 = pl.pallas_call(
        kernel,
        out_shape=jax.ShapeDtypeStruct((b, c, hw), vis.dtype),
        grid=grid,
        in_specs=in_specs,
        out_specs=act_spec,
        compiler_params=pltpu.CompilerParams(
            # TODO(synk): pltpu.CORE_PARALLEL on the pixel axis for explicit
            # v7x two-TensorCore sharding once validated on hardware.
            dimension_semantics=("parallel", "parallel"),
            vmem_limit_bytes=32 << 20),
    )(*args)
    return out3.reshape(b, c, h, w)


# ------------------------------ FeatureMerge --------------------------------

class FeatureMerge:
    """JAX/Pallas port of vgt_inference.ditod.FeatureMerge (inference)."""

    def __init__(self, feature_names, visual_dim, semantic_dim,
                 merge_type='Sum', dropout_ratio=0.1,
                 with_extra_fc=True, shortcut=False, key=None):
        assert merge_type in ('Sum', 'Concat', 'Weighted'), merge_type
        assert len(visual_dim) == len(semantic_dim)
        self.feature_names = feature_names
        self.merge_type = merge_type
        self.visual_dim = visual_dim
        self.textual_dim = semantic_dim
        self.with_extra_fc = with_extra_fc
        self.shortcut = shortcut
        # dropout_ratio: nn.Dropout is never applied in the torch forward().

        self.params = []
        if merge_type in ('Concat', 'Weighted'):
            if key is None:
                key = jax.random.PRNGKey(0)

            def lin(k_w, k_b, din, dout):
                lim = 1.0 / float(din) ** 0.5
                w = jax.random.uniform(k_w, (dout, din), jnp.float32,
                                       -lim, lim)            # torch (out, in)
                bias = jax.random.uniform(k_b, (dout,), jnp.float32,
                                          -lim, lim)
                return w, bias

            for idx in range(len(visual_dim)):
                cv, ct = visual_dim[idx], semantic_dim[idx]
                key, *ks = jax.random.split(key, 7)
                if with_extra_fc:
                    wv, bv = lin(ks[0], ks[1], cv, cv)
                    wt, bt = lin(ks[2], ks[3], ct, ct)
                    wv = wv.astype(jnp.bfloat16)              # bf16 weights
                    wt = wt.astype(jnp.bfloat16)
                    bv = bv.reshape(-1, 1)                    # (C,1) column bias
                    bt = bt.reshape(-1, 1)
                else:
                    wv = bv = wt = bt = None
                wa, ba = lin(ks[4], ks[5], cv + ct, cv)       # (C, Cv+Ct)
                wa = wa.astype(jnp.bfloat16)
                # Split the alpha weight so the kernel never materializes the
                # (2C, TP) concat buffer.
                wav, wat = wa[:, :cv], wa[:, cv:]
                self.params.append((wv, bv, wt, bt, wav, wat,
                                    ba.reshape(-1, 1)))

    def __call__(self, visual_feat, textual_feat):
        assert len(visual_feat) == len(textual_feat)
        # TODO(synk): pyramid levels sharing the same C could be concatenated
        # along the pixel axis and merged in a single pallas_call to amortize
        # launch + pipeline-priming overhead on small levels.
        merged = {}
        for idx, name in enumerate(self.feature_names):
            vis = visual_feat[name]   # NCHW
            txt = textual_feat[name]  # NCHW
            if self.merge_type == 'Sum':
                merged[name] = _sum_call(vis, txt)
            else:
                merged[name] = _fused_call(self.merge_type, self.with_extra_fc,
                                           self.shortcut, vis, txt,
                                           self.params[idx])
        return merged


# ----------------------------- pure-JAX reference ---------------------------

def _ref_forward(module, visual_feat, textual_feat):
    merged = {}
    for idx, name in enumerate(module.feature_names):
        vis = visual_feat[name]
        txt = textual_feat[name]
        if module.merge_type == 'Sum':
            merged[name] = vis + txt
            continue
        v = jnp.transpose(vis, (0, 2, 3, 1)).astype(jnp.float32)  # NHWC
        t = jnp.transpose(txt, (0, 2, 3, 1)).astype(jnp.float32)
        wv, bv, wt, bt, wav, wat, ba = module.params[idx]
        if module.with_extra_fc:
            v = jax.nn.relu(v @ wv.astype(jnp.float32).T + bv[:, 0])
            t = jax.nn.relu(t @ wt.astype(jnp.float32).T + bt[:, 0])
        z = (v @ wav.astype(jnp.float32).T
             + t @ wat.astype(jnp.float32).T + ba[:, 0])
        if module.merge_type == 'Concat':
            out = z
        else:
            a = jax.nn.sigmoid(z)
            out = v + a * t if module.shortcut else a * v + (1 - a) * t
        merged[name] = jnp.transpose(out, (0, 3, 1, 2))
    return merged


# ----------------------------------- main ------------------------------------

if __name__ == "__main__":
    key = jax.random.PRNGKey(0)
    feature_names = ["p2"]

    # (merge_type, with_extra_fc, shortcut, NCHW shape, dtype, tol)
    configs = [
        ("Sum",      True,  False, (2, 32, 16, 16), jnp.float32,  1e-5),
        ("Concat",   True,  False, (2, 32, 16, 16), jnp.float32,  3e-2),
        ("Weighted", True,  False, (2, 32, 16, 16), jnp.float32,  3e-2),
        ("Weighted", True,  True,  (2, 32, 16, 16), jnp.float32,  3e-2),
        ("Weighted", False, False, (2, 32, 16, 16), jnp.float32,  3e-2),
        ("Sum",      True,  False, (2, 32, 7, 9),   jnp.float32,  1e-5),
        ("Weighted", True,  False, (2, 32, 7, 9),   jnp.float32,  3e-2),
        ("Weighted", True,  False, (1, 32, 16, 16), jnp.bfloat16, 1e-1),
    ]

    ok = True
    for merge_type, extra_fc, shortcut, shape, dtype, tol in configs:
        b, c, h, w = shape
        k1, k2, k3, key = jax.random.split(key, 4)
        visual = {"p2": jax.random.normal(k1, shape, jnp.float32).astype(dtype)}
        textual = {"p2": jax.random.normal(k2, shape, jnp.float32).astype(dtype)}

        mod = FeatureMerge(feature_names, visual_dim=[c], semantic_dim=[c],
                           merge_type=merge_type, with_extra_fc=extra_fc,
                           shortcut=shortcut, key=k3)
        out = mod(visual, textual)
        ref = _ref_forward(mod, visual, textual)

        o = jax.block_until_ready(out["p2"])
        assert o.shape == shape and o.dtype == dtype
        of = jnp.asarray(o, jnp.float32)
        rf = jnp.asarray(ref["p2"], jnp.float32)
        if not jnp.allclose(of, rf, atol=tol, rtol=tol):
            ok = False
            print(f"MISMATCH {merge_type} extra_fc={extra_fc} "
                  f"shortcut={shortcut} shape={shape} dtype={dtype} "
                  f"max_err={float(jnp.max(jnp.abs(of - rf)))}")

    if ok:
        print("KERNEL_OK")
</pallas_src>

<mosaic_0001>
module attributes {stable_mosaic.version = 11 : i64} {
  func.func @_sum_kernel(%arg0: i32, %arg1: memref<64x128xf32, #tpu.memory_space<vmem>>, %arg2: memref<64x128xf32, #tpu.memory_space<vmem>>, %arg3: memref<64x128xf32, #tpu.memory_space<vmem>>) attributes {dimension_semantics = [#tpu.dimension_semantics<parallel>], iteration_bounds = array<i64: 2>, scalar_prefetch = 0 : i64, scratch_operands = 0 : i64, tpu.core_type = #tpu.core_type<tc>, window_params = [{transform_indices = @transform_0, window_bounds = array<i64: 64, 128>}, {transform_indices = @transform_1, window_bounds = array<i64: 64, 128>}, {transform_indices = @transform_2, window_bounds = array<i64: 64, 128>}]} {
    %c0 = arith.constant 0 : index
    %c0_0 = arith.constant 0 : index
    %0 = vector.load %arg1[%c0, %c0_0] : memref<64x128xf32, #tpu.memory_space<vmem>>, vector<64x128xf32>
    %c0_1 = arith.constant 0 : index
    %c0_2 = arith.constant 0 : index
    %1 = vector.load %arg2[%c0_1, %c0_2] : memref<64x128xf32, #tpu.memory_space<vmem>>, vector<64x128xf32>
    %2 = arith.addf %0, %1 : vector<64x128xf32>
    %c0_3 = arith.constant 0 : index
    %c0_4 = arith.constant 0 : index
    %3 = vector.load %arg3[%c0_3, %c0_4] : memref<64x128xf32, #tpu.memory_space<vmem>>, vector<64x128xf32>
    tpu.vector_store %arg3[%c0_3, %c0_4], %2 {strides = array<i32>} : memref<64x128xf32, #tpu.memory_space<vmem>>, vector<64x128xf32>,
    return
  }
  func.func @transform_0(%arg0: i32) -> (i32, i32) {
    %c0_i32 = arith.constant 0 : i32
    %c0_i32_0 = arith.constant 0 : i32
    return %arg0, %c0_i32 : i32, i32
  }
  func.func @transform_1(%arg0: i32) -> (i32, i32) {
    %c0_i32 = arith.constant 0 : i32
    %c0_i32_0 = arith.constant 0 : i32
    return %arg0, %c0_i32 : i32, i32
  }
  func.func @transform_2(%arg0: i32) -> (i32, i32) {
    %c0_i32 = arith.constant 0 : i32
    %c0_i32_0 = arith.constant 0 : i32
    return %arg0, %c0_i32 : i32, i32
  }
}

</mosaic_0001>

<llo_original>
// kernel: tpu_custom_call.1
$region0: #{tpu_custom_call.1}
  #allocation0 [shape = 'u32[]', space=smem, size = 0x4, offset = 0x4, fixed_abs, tag = 'smem constant byte address 0x4 - core index']
  #allocation1 [shape = 'u32[144,128]{1,0:T(1,128)}', space=vmem, size = 0x12000, scoped, tag = 'internal scratch']
  %s0 = inlined_call_operand.hbm [shape: f32[128,128], index: 0, kind: input, shape index: {}]
  %s1 = inlined_call_operand.hbm [shape: f32[128,128], index: 1, kind: input, shape index: {}]
  %s2 = inlined_call_operand.hbm [shape: f32[128,128], index: 2, kind: output, shape index: {}]
  %s3 = sld [smem:[#allocation0]]
  $region49: #{tpu_custom_call.1} parent=0
    _
  %s5 = ssub.s32 1, %s3
  %s6 = scalar_select 0, %s5, %s3
  $region1: #{tpu_custom_call.1} parent=0
    #allocation2 [shape = 'u8[65536]{0}', space=vmem, size = 0x10000, scoped, tag = 'input window, operand 0']
    #allocation3 [shape = 's32[2]{0}', space=sflag, size = 0x8, scoped, tag = 'scoped memory for tpu_custom_call.1']
    #allocation4 [shape = 's32[2]{0}', space=sflag, size = 0x8, scoped, tag = 'scoped memory for tpu_custom_call.1']
    #allocation5 [shape = 'u8[65536]{0}', space=vmem, size = 0x10000, scoped, tag = 'input window, operand 1']
    #allocation6 [shape = 's32[2]{0}', space=sflag, size = 0x8, scoped, tag = 'scoped memory for tpu_custom_call.1']
    #allocation7 [shape = 'u8[65536]{0}', space=vmem, size = 0x10000, scoped, tag = 'output window, operand 0']
    %7 = vsyncpa [#allocation3], 0
    %s8 = scalar_lea.sflag [#allocation3], 1
    %9 = vsyncpa %s8, 0
    %10 = vsyncpa [#allocation6], 0
    %s11 = scalar_lea.sflag [#allocation6], 1
    %12 = vsyncpa %s11, 0
    %13 = vsyncpa [#allocation4], 0
    %s14 = scalar_lea.sflag [#allocation4], 1
    %15 = vsyncpa %s14, 0
    loop: start=0, step=1, limit=4
    $region2: #{tpu_custom_call.1} parent=1 // loop_pre_header
      _
    $region3: #{tpu_custom_call.1} parent=1 // loop_header
      %s17 = sphi 0, %s21
      %p18 = scmp.ge.s32.totalorder %s17, 4
      %s27 = sphi 0, %s29
      %s30 = sphi 0, %s27
      %s31 = sphi 0, %s30
      %s47 = sphi 0, %s31
      %s53 = sphi 0, %s55
      %s56 = sphi 0, %s53
      %s57 = sphi 0, %s56
      %s73 = sphi 0, %s57
      %s79 = sphi 0, %s81
      %s82 = sphi 0, %s79
      %s83 = sphi 0, %s82
      %s99 = sphi 0, %s83
    $region4: #{tpu_custom_call.1} parent=1 // loop_header_branch
      %20 = sbr.rel (%p18) target = $region8
    $region5: #{tpu_custom_call.1} parent=1 // loop_body
      %s22 = ssub.s32 %s17, 1
      %s23 = ssub.s32 %s17, 2
      %s24 = sadd.s32 %s17, 1
      %s25 = ssub.s32 %s17, %s24
      %p26 = scmp.eq.s32.totalorder %s25, 0
      %s28 = sadd.s32 %s27, 1
      %s29 = scalar_select %p26, %s27, %s28
      %p32 = pneg %p26
      %p33 = scmp.eq.s32.totalorder %s17, 1
      %p34 = por %p32, %p33
      %p35 = scmp.ne.s32.totalorder %s27, %s30
      %p36 = scmp.eq.s32.totalorder %s17, 0
      %p37 = por %p35, %p36
      %p38 = scmp.ne.s32.totalorder %s27, %s30
      %p39 = scmp.eq.s32.totalorder %s22, 1
      %p40 = por %p38, %p39
      %p41 = scmp.ne.s32.totalorder %s30, %s31
      %p42 = scmp.eq.s32.totalorder %s22, 0
      %p43 = por %p41, %p42
      %p44 = scmp.ne.s32.totalorder %s30, %s31
      %p45 = scmp.eq.s32.totalorder %s23, 1
      %p46 = por %p44, %p45
      %p48 = scmp.ne.s32.totalorder %s31, %s47
      %p49 = scmp.eq.s32.totalorder %s23, 0
      %p50 = por %p48, %p49
      %s51 = ssub.s32 %s17, %s24
      %p52 = scmp.eq.s32.totalorder %s51, 0
      %s54 = sadd.s32 %s53, 1
      %s55 = scalar_select %p52, %s53, %s54
      %p58 = pneg %p52
      %p59 = scmp.eq.s32.totalorder %s17, 1
      %p60 = por %p58, %p59
      %p61 = scmp.ne.s32.totalorder %s53, %s56
      %p62 = scmp.eq.s32.totalorder %s17, 0
      %p63 = por %p61, %p62
      %p64 = scmp.ne.s32.totalorder %s53, %s56
      %p65 = scmp.eq.s32.totalorder %s22, 1
      %p66 = por %p64, %p65
      %p67 = scmp.ne.s32.totalorder %s56, %s57
      %p68 = scmp.eq.s32.totalorder %s22, 0
      %p69 = por %p67, %p68
      %p70 = scmp.ne.s32.totalorder %s56, %s57
      %p71 = scmp.eq.s32.totalorder %s23, 1
      %p72 = por %p70, %p71
      %p74 = scmp.ne.s32.totalorder %s57, %s73
      %p75 = scmp.eq.s32.totalorder %s23, 0
      %p76 = por %p74, %p75
      %s77 = ssub.s32 %s17, %s24
      %p78 = scmp.eq.s32.totalorder %s77, 0
      %s80 = sadd.s32 %s79, 1
      %s81 = scalar_select %p78, %s79, %s80
      %p84 = pneg %p78
      %p85 = scmp.eq.s32.totalorder %s17, 1
      %p86 = por %p84, %p85
      %p87 = scmp.ne.s32.totalorder %s79, %s82
      %p88 = scmp.eq.s32.totalorder %s17, 0
      %p89 = por %p87, %p88
      %p90 = scmp.ne.s32.totalorder %s79, %s82
      %p91 = scmp.eq.s32.totalorder %s22, 1
      %p92 = por %p90, %p91
      %p93 = scmp.ne.s32.totalorder %s82, %s83
      %p94 = scmp.eq.s32.totalorder %s22, 0
      %p95 = por %p93, %p94
      %p96 = scmp.ne.s32.totalorder %s82, %s83
      %p97 = scmp.eq.s32.totalorder %s23, 1
      %p98 = por %p96, %p97
      %p100 = scmp.ne.s32.totalorder %s83, %s99
      %p101 = scmp.eq.s32.totalorder %s23, 0
      %p102 = por %p100, %p101
      %p103 = scmp.le.s32.totalorder 1, %s17
      %p104 = scmp.lt.s32.totalorder %s17, 3
      %p105 = pnand %p103, %p104
      %p106 = pneg %p105
      // Predicated region
      $region9: #{tpu_custom_call.1} parent=5 // pred_check
        _
      $region10: #{tpu_custom_call.1} parent=5 // pred_check_branch
        %108 = sbr.rel (%p105) target = $region12
      $region11: #{tpu_custom_call.1} parent=5 // pred_region
        %s109 = ssub.s32 %s17, 1
      $region12: #{tpu_custom_call.1} parent=5 // pred_fallthru
        _
      %p110 = scmp.lt.s32.totalorder %s17, 2
      // Predicated region
      $region13: #{tpu_custom_call.1} parent=5 // pred_check
        %p111 = pneg %p110
      $region14: #{tpu_custom_call.1} parent=5 // pred_check_branch
        %113 = sbr.rel (%p111) target = $region16
      $region15: #{tpu_custom_call.1} parent=5 // pred_region
        // Predicated region
        $region17: #{tpu_custom_call.1} parent=15 // pred_check
          %p114 = pneg %p37
        $region18: #{tpu_custom_call.1} parent=15 // pred_check_branch
          %116 = sbr.rel (%p114) target = $region20
        $region19: #{tpu_custom_call.1} parent=15 // pred_region
          %s117 = sand.u32 %s27, 1
          %s118 = scalar_lea.sflag [#allocation3], %s117
          %s119 = sand.u32 %s27, 1
          %s120 = smul.addr %s119, 64
          %s121 = scalar_lea.vmem [#allocation2], %s120
          %s122 = smul.u32 8, %s17
          %s124 = ssub.s32 1024, 1024
          %125 = vsyncadd %s118, %s124
          %s126 = smul.addr %s122, 128
          %s127 = scalar_lea.hbm %s0, %s126
          %s128 = sshll.u32 %s121, 4
          %s129 = int_to_ptr.vmem [resolvable:$true] %s128
          %134 = dma.hbm_to_vmem [thread:$0]  %s127, 1024, %s129, %s118, 128, 128, 8
        $region20: #{tpu_custom_call.1} parent=15 // pred_fallthru
          _
        // Predicated region
        $region21: #{tpu_custom_call.1} parent=15 // pred_check
          %p135 = pneg %p63
        $region22: #{tpu_custom_call.1} parent=15 // pred_check_branch
          %137 = sbr.rel (%p135) target = $region24
        $region23: #{tpu_custom_call.1} parent=15 // pred_region
          %s138 = sand.u32 %s53, 1
          %s139 = scalar_lea.sflag [#allocation6], %s138
          %s140 = sand.u32 %s53, 1
          %s141 = smul.addr %s140, 64
          %s142 = scalar_lea.vmem [#allocation5], %s141
          %s143 = smul.u32 8, %s17
          %s145 = ssub.s32 1024, 1024
          %146 = vsyncadd %s139, %s145
          %s147 = smul.addr %s143, 128
          %s148 = scalar_lea.hbm %s1, %s147
          %s149 = sshll.u32 %s142, 4
          %s150 = int_to_ptr.vmem [resolvable:$true] %s149
          %155 = dma.hbm_to_vmem [thread:$0]  %s148, 1024, %s150, %s139, 128, 128, 8
        $region24: #{tpu_custom_call.1} parent=15 // pred_fallthru
          _
      $region16: #{tpu_custom_call.1} parent=5 // pred_fallthru
        _
      %p156 = scmp.le.s32.totalorder 1, %s17
      %p157 = scmp.lt.s32.totalorder %s17, 3
      %p158 = pnand %p156, %p157
      %p159 = pneg %p158
      // Predicated region
      $region25: #{tpu_custom_call.1} parent=5 // pred_check
        _
      $region26: #{tpu_custom_call.1} parent=5 // pred_check_branch
        %161 = sbr.rel (%p158) target = $region28
      $region27: #{tpu_custom_call.1} parent=5 // pred_region
        %s162 = ssub.s32 %s17, 1
        %s163 = sand.u32 %s30, 1
        %s164 = scalar_lea.sflag [#allocation3], %s163
        %s165 = sand.u32 %s30, 1
        %s166 = smul.addr %s165, 64
        %s167 = scalar_lea.vmem [#allocation2], %s166
        // Predicated region
        $region29: #{tpu_custom_call.1} parent=27 // pred_check
          %p168 = pneg %p43
        $region30: #{tpu_custom_call.1} parent=27 // pred_check_branch
          %170 = sbr.rel (%p168) target = $region32
        $region31: #{tpu_custom_call.1} parent=27 // pred_region
          %171 = dma.done %s164, 1024
        $region32: #{tpu_custom_call.1} parent=27 // pred_fallthru
          _
        %s172 = sand.u32 %s56, 1
        %s173 = scalar_lea.sflag [#allocation6], %s172
        %s174 = sand.u32 %s56, 1
        %s175 = smul.addr %s174, 64
        %s176 = scalar_lea.vmem [#allocation5], %s175
        // Predicated region
        $region33: #{tpu_custom_call.1} parent=27 // pred_check
          %p177 = pneg %p69
        $region34: #{tpu_custom_call.1} parent=27 // pred_check_branch
          %179 = sbr.rel (%p177) target = $region36
        $region35: #{tpu_custom_call.1} parent=27 // pred_region
          %180 = dma.done %s173, 1024
        $region36: #{tpu_custom_call.1} parent=27 // pred_fallthru
          _
        %s181 = sand.u32 %s30, 1
        %s182 = scalar_lea.sflag [#allocation3], %s181
        %s183 = sand.u32 %s30, 1
        %s184 = smul.addr %s183, 64
        %s185 = scalar_lea.vmem [#allocation2], %s184
        %p186 = pneg %p43
        %p187 = pneg %p40
        %s188 = sand.u32 %s56, 1
        %s189 = scalar_lea.sflag [#allocation6], %s188
        %s190 = sand.u32 %s56, 1
        %s191 = smul.addr %s190, 64
        %s192 = scalar_lea.vmem [#allocation5], %s191
        %p193 = pneg %p69
        %p194 = pneg %p66
        %p195 = pneg %p95
        %p196 = pneg %p92
        %s197 = sand.u32 %s82, 1
        %s198 = scalar_lea.sflag [#allocation4], %s197
        %s199 = sand.u32 %s82, 1
        %s200 = smul.addr %s199, 64
        %s201 = scalar_lea.vmem [#allocation7], %s200
        %s202 = smul.u32 8, %s22
        %s203 = smul.u32 8, %s22
        %s204 = smul.u32 8, %s22
        %v205 = vld [vmem:[%s167] sm:$0xff]
        %v206 = vld [vmem:[%s167 + $0x8] sm:$0xff]
        %v207 = vld [vmem:[%s167 + $0x10] sm:$0xff]
        %v208 = vld [vmem:[%s167 + $0x18] sm:$0xff]
        %v209 = vld [vmem:[%s167 + $0x20] sm:$0xff]
        %v210 = vld [vmem:[%s167 + $0x28] sm:$0xff]
        %v211 = vld [vmem:[%s167 + $0x30] sm:$0xff]
        %v212 = vld [vmem:[%s167 + $0x38] sm:$0xff]
        %v213 = vld [vmem:[%s176] sm:$0xff]
        %v214 = vld [vmem:[%s176 + $0x8] sm:$0xff]
        %v215 = vld [vmem:[%s176 + $0x10] sm:$0xff]
        %v216 = vld [vmem:[%s176 + $0x18] sm:$0xff]
        %v217 = vld [vmem:[%s176 + $0x20] sm:$0xff]
        %v218 = vld [vmem:[%s176 + $0x28] sm:$0xff]
        %v219 = vld [vmem:[%s176 + $0x30] sm:$0xff]
        %v220 = vld [vmem:[%s176 + $0x38] sm:$0xff]
        %v221 = vadd.f32 %v205, %v213
        %v222 = vadd.f32 %v206, %v214
        %v223 = vadd.f32 %v207, %v215
        %v224 = vadd.f32 %v208, %v216
        %v225 = vadd.f32 %v209, %v217
        %v226 = vadd.f32 %v210, %v218
        %v227 = vadd.f32 %v211, %v219
        %v228 = vadd.f32 %v212, %v220
        %229 = vst [vmem:[%s201] sm:$0xff] %v221
        %230 = vst [vmem:[%s201 + $0x8] sm:$0xff] %v222
        %231 = vst [vmem:[%s201 + $0x10] sm:$0xff] %v223
        %232 = vst [vmem:[%s201 + $0x18] sm:$0xff] %v224
        %233 = vst [vmem:[%s201 + $0x20] sm:$0xff] %v225
        %234 = vst [vmem:[%s201 + $0x28] sm:$0xff] %v226
        %235 = vst [vmem:[%s201 + $0x30] sm:$0xff] %v227
        %236 = vst [vmem:[%s201 + $0x38] sm:$0xff] %v228
        %s237 = sand.u32 %s82, 1
        %s238 = scalar_lea.sflag [#allocation4], %s237
        %s239 = sand.u32 %s82, 1
        %s240 = smul.addr %s239, 64
        %s241 = scalar_lea.vmem [#allocation7], %s240
        // Predicated region
        $region37: #{tpu_custom_call.1} parent=27 // pred_check
          %p242 = pneg %p92
        $region38: #{tpu_custom_call.1} parent=27 // pred_check_branch
          %244 = sbr.rel (%p242) target = $region40
        $region39: #{tpu_custom_call.1} parent=27 // pred_region
          %s245 = smul.u32 8, %s22
          %s247 = ssub.s32 1024, 1024
          %248 = vsyncadd %s238, %s247
          %s249 = smul.addr %s245, 128
          %s250 = scalar_lea.hbm %s2, %s249
          %s251 = sshll.u32 %s241, 4
          %s252 = int_to_ptr.vmem [resolvable:$true] %s251
          %257 = dma.vmem_to_hbm [thread:$0]  %s252, 1024, %s250, %s238, 128, 128, 8
        $region40: #{tpu_custom_call.1} parent=27 // pred_fallthru
          _
      $region28: #{tpu_custom_call.1} parent=5 // pred_fallthru
        _
      %p258 = scmp.le.s32.totalorder 2, %s17
      // Predicated region
      $region41: #{tpu_custom_call.1} parent=5 // pred_check
        %p259 = pneg %p258
      $region42: #{tpu_custom_call.1} parent=5 // pred_check_branch
        %261 = sbr.rel (%p259) target = $region44
      $region43: #{tpu_custom_call.1} parent=5 // pred_region
        %s262 = ssub.s32 %s17, 2
        // Predicated region
        $region45: #{tpu_custom_call.1} parent=43 // pred_check
          %p263 = pneg %p98
        $region46: #{tpu_custom_call.1} parent=43 // pred_check_branch
          %265 = sbr.rel (%p263) target = $region48
        $region47: #{tpu_custom_call.1} parent=43 // pred_region
          %s266 = sand.u32 %s83, 1
          %s267 = scalar_lea.sflag [#allocation4], %s266
          %s268 = sand.u32 %s83, 1
          %s269 = smul.addr %s268, 64
          %s270 = scalar_lea.vmem [#allocation7], %s269
          %271 = dma.done %s267, 1024
        $region48: #{tpu_custom_call.1} parent=43 // pred_fallthru
          _
      $region44: #{tpu_custom_call.1} parent=5 // pred_fallthru
        _
    $region6: #{tpu_custom_call.1} parent=1 // loop_footer
      %s21 = sadd.s32 1, %s17
    $region7: #{tpu_custom_call.1} parent=1 // loop_footer_branch
      %16 = sbr.rel target = $region3
    $region8: #{tpu_custom_call.1} parent=1 // loop_exit
      _
    %272 = vsyncpa [#allocation3], 1
    %s273 = scalar_lea.sflag [#allocation3], 1
    %274 = vsyncpa %s273, 1
    %275 = vsyncpa [#allocation6], 1
    %s276 = scalar_lea.sflag [#allocation6], 1
    %277 = vsyncpa %s276, 1
    %278 = vsyncpa [#allocation4], 1
    %s279 = scalar_lea.sflag [#allocation4], 1
    %280 = vsyncpa %s279, 1

</llo_original>
